<compile_context>
chip_gen: v7x
topology: tpu7x:2x2x1
jax: 0.10.0
libtpu: 0.0.40
codegen_flags: <defaults>
</compile_context>

<pallas_src>
import functools

import jax
import jax.numpy as jnp
from jax.experimental import pallas as pl
from jax.experimental.pallas import tpu as pltpu

LANE = 128             # lane width
SUBLANE = 8            # f32 sublane count
ROWS_PER_STEP = 128    # 128 rows x 128 lanes = 16384 points per grid step
SMALL_N = 4096         # below this, the pure-JAX path is used by default


def _sampson_kernel(f_ref, pts_ref, out_ref, *, eps):
    # f_ref  : (3, 3)          fundamental matrix in SMEM (scalar reads)
    # pts_ref: (4, R, 128)     packed [x1; y1; x2; y2] tile in VMEM (dense vregs)
    # out_ref: (R, 128)        per-point Sampson distance (dense, unmasked stores)
    x1 = pts_ref[0]
    y1 = pts_ref[1]
    x2 = pts_ref[2]
    y2 = pts_ref[3]

    f00 = f_ref[0, 0]; f01 = f_ref[0, 1]; f02 = f_ref[0, 2]
    f10 = f_ref[1, 0]; f11 = f_ref[1, 1]; f12 = f_ref[1, 2]
    f20 = f_ref[2, 0]; f21 = f_ref[2, 1]; f22 = f_ref[2, 2]

    # l2 = F @ pts1_h^T   (epipolar lines in image 2); pts1_h = (x1, y1, 1)
    l2x = f00 * x1 + f01 * y1 + f02
    l2y = f10 * x1 + f11 * y1 + f12
    l2z = f20 * x1 + f21 * y1 + f22

    # l1 = F^T @ pts2_h^T (epipolar lines in image 1); only first two rows needed
    l1x = f00 * x2 + f10 * y2 + f20
    l1y = f01 * x2 + f11 * y2 + f21

    # dd = sum(l2^T * pts2_h, dim=1) = x2*l2x + y2*l2y + 1*l2z
    dd = x2 * l2x + y2 * l2y + l2z

    denom = eps + l1x * l1x + l1y * l1y + l2x * l2x + l2y * l2y
    out_ref[...] = (dd * dd) * pl.reciprocal(denom, approx=False)


def _sampson_jax(pts1, pts2, fmat, eps=1e-8):
    """Pure-JAX replica of the PyTorch math (float32). Also the small-N path."""
    x1 = pts1[:, 0].astype(jnp.float32)
    y1 = pts1[:, 1].astype(jnp.float32)
    x2 = pts2[:, 0].astype(jnp.float32)
    y2 = pts2[:, 1].astype(jnp.float32)
    f = fmat.astype(jnp.float32)
    l2x = f[0, 0] * x1 + f[0, 1] * y1 + f[0, 2]
    l2y = f[1, 0] * x1 + f[1, 1] * y1 + f[1, 2]
    l2z = f[2, 0] * x1 + f[2, 1] * y1 + f[2, 2]
    l1x = f[0, 0] * x2 + f[1, 0] * y2 + f[2, 0]
    l1y = f[0, 1] * x2 + f[1, 1] * y2 + f[2, 1]
    dd = x2 * l2x + y2 * l2y + l2z
    denom = eps + l1x * l1x + l1y * l1y + l2x * l2x + l2y * l2y
    return (dd * dd) / denom


def sampson_loss(pts1, pts2, fmat, eps=1e-8, use_kernel=None):
    """pts1, pts2: (N, 2) correspondences; fmat: (3, 3). Returns (N,) Sampson loss."""
    n = pts1.shape[0]
    if use_kernel is None:
        use_kernel = n >= SMALL_N
    if not use_kernel:
        return _sampson_jax(pts1, pts2, fmat, eps)

    # ---- pack [x1, y1, x2, y2] into one lane/sublane-dense slab --------------
    n_rows = -(-n // LANE)                        # ceil(n / 128)
    n_rows = -(-n_rows // SUBLANE) * SUBLANE      # sublane-dense row count
    rows_per_step = min(ROWS_PER_STEP, n_rows)
    n_rows = -(-n_rows // rows_per_step) * rows_per_step   # grid divides evenly
    n_pad = n_rows * LANE

    coords = jnp.concatenate(
        [pts1.astype(jnp.float32), pts2.astype(jnp.float32)], axis=1)   # (N, 4)
    coords = jnp.zeros((n_pad, 4), jnp.float32).at[:n].set(coords)
    packed = coords.T.reshape(4, n_rows, LANE)   # single re-layout pass (4N floats)

    fmat = fmat.astype(jnp.float32)

    out = pl.pallas_call(
        functools.partial(_sampson_kernel, eps=eps),
        out_shape=jax.ShapeDtypeStruct((n_rows, LANE), jnp.float32),
        grid=(n_rows // rows_per_step,),
        in_specs=[
            pl.BlockSpec(memory_space=pltpu.MemorySpace.SMEM),             # F (3,3)
            pl.BlockSpec((4, rows_per_step, LANE), lambda i: (0, i, 0)),   # packed pts
        ],
        out_specs=pl.BlockSpec((rows_per_step, LANE), lambda i: (i, 0)),
        compiler_params=pltpu.CompilerParams(
            dimension_semantics=("parallel",)),
    )(fmat, packed)
    return out.reshape(n_pad)[:n]                # reshape is a free bitcast


if __name__ == "__main__":
    key = jax.random.PRNGKey(0)
    k1, k2, k3 = jax.random.split(key, 3)

    num_points = 200  # deliberately not a multiple of 128 to exercise padding
    pts1 = jax.random.uniform(k1, (num_points, 2), jnp.float32) * 64.0
    pts2 = pts1 + jax.random.normal(k2, (num_points, 2), jnp.float32) * 0.5

    # Deterministic synthetic fundamental matrix (rank-2, normalized) in place
    # of cv2.findFundamentalMat.
    fmat = jax.random.normal(k3, (3, 3), jnp.float32)
    u, s, vt = jnp.linalg.svd(fmat)
    fmat = u @ jnp.diag(s.at[2].set(0.0)) @ vt
    fmat = fmat / jnp.linalg.norm(fmat)

    # 1) Pallas kernel path (forced) with ragged N inside a single grid step.
    loss_k = jax.block_until_ready(sampson_loss(pts1, pts2, fmat, use_kernel=True))
    ref = _sampson_jax(pts1, pts2, fmat)
    assert loss_k.shape == (num_points,)
    assert jnp.allclose(loss_k, ref, rtol=1e-5, atol=1e-6), \
        "kernel mismatch vs reference (small N)"

    # 2) Pallas kernel path with a multi-step grid (2 steps of 16384 points).
    n_big = 20000
    kb1, kb2 = jax.random.split(jax.random.PRNGKey(1))
    big1 = jax.random.uniform(kb1, (n_big, 2), jnp.float32) * 64.0
    big2 = big1 + jax.random.normal(kb2, (n_big, 2), jnp.float32) * 0.5
    loss_big = jax.block_until_ready(sampson_loss(big1, big2, fmat, use_kernel=True))
    ref_big = _sampson_jax(big1, big2, fmat)
    assert loss_big.shape == (n_big,)
    assert jnp.allclose(loss_big, ref_big, rtol=1e-5, atol=1e-6), \
        "kernel mismatch vs reference (multi-step grid)"

    # 3) Small-N fast path (pure JAX) agrees as well.
    loss_fast = jax.block_until_ready(sampson_loss(pts1, pts2, fmat))
    assert jnp.allclose(loss_fast, ref, rtol=1e-6, atol=1e-8), "fast-path mismatch"

    print("KERNEL_OK")
</pallas_src>

<mosaic_0001>
module attributes {stable_mosaic.version = 11 : i64} {
  func.func @_sampson_kernel(%arg0: i32, %arg1: memref<3x3xf32, #tpu.memory_space<smem>>, %arg2: memref<4x8x128xf32, #tpu.memory_space<vmem>>, %arg3: memref<8x128xf32, #tpu.memory_space<vmem>>) attributes {dimension_semantics = [#tpu.dimension_semantics<parallel>], iteration_bounds = array<i64: 1>, scalar_prefetch = 0 : i64, scratch_operands = 0 : i64, tpu.core_type = #tpu.core_type<tc>, window_params = [{transform_indices = @transform_0, window_bounds = array<i64: 3, 3>}, {transform_indices = @transform_1, window_bounds = array<i64: 4, 8, 128>}, {transform_indices = @transform_2, window_bounds = array<i64: 8, 128>}]} {
    %c0 = arith.constant 0 : index
    %c0_0 = arith.constant 0 : index
    %c0_1 = arith.constant 0 : index
    %0 = vector.load %arg2[%c0, %c0_0, %c0_1] : memref<4x8x128xf32, #tpu.memory_space<vmem>>, vector<1x8x128xf32>
    %1 = vector.shape_cast %0 : vector<1x8x128xf32> to vector<8x128xf32>
    %c1 = arith.constant 1 : index
    %c0_2 = arith.constant 0 : index
    %c0_3 = arith.constant 0 : index
    %2 = vector.load %arg2[%c1, %c0_2, %c0_3] : memref<4x8x128xf32, #tpu.memory_space<vmem>>, vector<1x8x128xf32>
    %3 = vector.shape_cast %2 : vector<1x8x128xf32> to vector<8x128xf32>
    %c2 = arith.constant 2 : index
    %c0_4 = arith.constant 0 : index
    %c0_5 = arith.constant 0 : index
    %4 = vector.load %arg2[%c2, %c0_4, %c0_5] : memref<4x8x128xf32, #tpu.memory_space<vmem>>, vector<1x8x128xf32>
    %5 = vector.shape_cast %4 : vector<1x8x128xf32> to vector<8x128xf32>
    %c3 = arith.constant 3 : index
    %c0_6 = arith.constant 0 : index
    %c0_7 = arith.constant 0 : index
    %6 = vector.load %arg2[%c3, %c0_6, %c0_7] : memref<4x8x128xf32, #tpu.memory_space<vmem>>, vector<1x8x128xf32>
    %7 = vector.shape_cast %6 : vector<1x8x128xf32> to vector<8x128xf32>
    %c0_8 = arith.constant 0 : index
    %c0_9 = arith.constant 0 : index
    %8 = memref.load %arg1[%c0_8, %c0_9] : memref<3x3xf32, #tpu.memory_space<smem>>
    %c0_10 = arith.constant 0 : index
    %c1_11 = arith.constant 1 : index
    %9 = memref.load %arg1[%c0_10, %c1_11] : memref<3x3xf32, #tpu.memory_space<smem>>
    %c0_12 = arith.constant 0 : index
    %c2_13 = arith.constant 2 : index
    %10 = memref.load %arg1[%c0_12, %c2_13] : memref<3x3xf32, #tpu.memory_space<smem>>
    %c1_14 = arith.constant 1 : index
    %c0_15 = arith.constant 0 : index
    %11 = memref.load %arg1[%c1_14, %c0_15] : memref<3x3xf32, #tpu.memory_space<smem>>
    %c1_16 = arith.constant 1 : index
    %c1_17 = arith.constant 1 : index
    %12 = memref.load %arg1[%c1_16, %c1_17] : memref<3x3xf32, #tpu.memory_space<smem>>
    %c1_18 = arith.constant 1 : index
    %c2_19 = arith.constant 2 : index
    %13 = memref.load %arg1[%c1_18, %c2_19] : memref<3x3xf32, #tpu.memory_space<smem>>
    %c2_20 = arith.constant 2 : index
    %c0_21 = arith.constant 0 : index
    %14 = memref.load %arg1[%c2_20, %c0_21] : memref<3x3xf32, #tpu.memory_space<smem>>
    %c2_22 = arith.constant 2 : index
    %c1_23 = arith.constant 1 : index
    %15 = memref.load %arg1[%c2_22, %c1_23] : memref<3x3xf32, #tpu.memory_space<smem>>
    %c2_24 = arith.constant 2 : index
    %c2_25 = arith.constant 2 : index
    %16 = memref.load %arg1[%c2_24, %c2_25] : memref<3x3xf32, #tpu.memory_space<smem>>
    %17 = vector.broadcast %8 : f32 to vector<8x128xf32>
    %18 = arith.mulf %17, %1 : vector<8x128xf32>
    %19 = vector.broadcast %9 : f32 to vector<8x128xf32>
    %20 = arith.mulf %19, %3 : vector<8x128xf32>
    %21 = arith.addf %18, %20 : vector<8x128xf32>
    %22 = vector.broadcast %10 : f32 to vector<8x128xf32>
    %23 = arith.addf %21, %22 : vector<8x128xf32>
    %24 = vector.broadcast %11 : f32 to vector<8x128xf32>
    %25 = arith.mulf %24, %1 : vector<8x128xf32>
    %26 = vector.broadcast %12 : f32 to vector<8x128xf32>
    %27 = arith.mulf %26, %3 : vector<8x128xf32>
    %28 = arith.addf %25, %27 : vector<8x128xf32>
    %29 = vector.broadcast %13 : f32 to vector<8x128xf32>
    %30 = arith.addf %28, %29 : vector<8x128xf32>
    %31 = vector.broadcast %14 : f32 to vector<8x128xf32>
    %32 = arith.mulf %31, %1 : vector<8x128xf32>
    %33 = vector.broadcast %15 : f32 to vector<8x128xf32>
    %34 = arith.mulf %33, %3 : vector<8x128xf32>
    %35 = arith.addf %32, %34 : vector<8x128xf32>
    %36 = vector.broadcast %16 : f32 to vector<8x128xf32>
    %37 = arith.addf %35, %36 : vector<8x128xf32>
    %38 = vector.broadcast %8 : f32 to vector<8x128xf32>
    %39 = arith.mulf %38, %5 : vector<8x128xf32>
    %40 = vector.broadcast %11 : f32 to vector<8x128xf32>
    %41 = arith.mulf %40, %7 : vector<8x128xf32>
    %42 = arith.addf %39, %41 : vector<8x128xf32>
    %43 = vector.broadcast %14 : f32 to vector<8x128xf32>
    %44 = arith.addf %42, %43 : vector<8x128xf32>
    %45 = vector.broadcast %9 : f32 to vector<8x128xf32>
    %46 = arith.mulf %45, %5 : vector<8x128xf32>
    %47 = vector.broadcast %12 : f32 to vector<8x128xf32>
    %48 = arith.mulf %47, %7 : vector<8x128xf32>
    %49 = arith.addf %46, %48 : vector<8x128xf32>
    %50 = vector.broadcast %15 : f32 to vector<8x128xf32>
    %51 = arith.addf %49, %50 : vector<8x128xf32>
    %52 = arith.mulf %5, %23 : vector<8x128xf32>
    %53 = arith.mulf %7, %30 : vector<8x128xf32>
    %54 = arith.addf %52, %53 : vector<8x128xf32>
    %55 = arith.addf %54, %37 : vector<8x128xf32>
    %56 = arith.mulf %44, %44 : vector<8x128xf32>
    %cst = arith.constant 9.99999993E-9 : f32
    %57 = vector.broadcast %cst : f32 to vector<8x128xf32>
    %58 = arith.addf %57, %56 : vector<8x128xf32>
    %59 = arith.mulf %51, %51 : vector<8x128xf32>
    %60 = arith.addf %58, %59 : vector<8x128xf32>
    %61 = arith.mulf %23, %23 : vector<8x128xf32>
    %62 = arith.addf %60, %61 : vector<8x128xf32>
    %63 = arith.mulf %30, %30 : vector<8x128xf32>
    %64 = arith.addf %62, %63 : vector<8x128xf32>
    %65 = arith.mulf %55, %55 : vector<8x128xf32>
    %66 = tpu.reciprocal %64 : vector<8x128xf32> -> vector<8x128xf32>
    %67 = arith.mulf %65, %66 : vector<8x128xf32>
    %c0_26 = arith.constant 0 : index
    %c0_27 = arith.constant 0 : index
    %68 = vector.load %arg3[%c0_26, %c0_27] : memref<8x128xf32, #tpu.memory_space<vmem>>, vector<8x128xf32>
    tpu.vector_store %arg3[%c0_26, %c0_27], %67 {strides = array<i32>} : memref<8x128xf32, #tpu.memory_space<vmem>>, vector<8x128xf32>,
    return
  }
  func.func @transform_0(%arg0: i32) -> (i32, i32) {
    %c0_i32 = arith.constant 0 : i32
    %c0_i32_0 = arith.constant 0 : i32
    %c0_i32_1 = arith.constant 0 : i32
    return %c0_i32, %c0_i32_0 : i32, i32
  }
  func.func @transform_1(%arg0: i32) -> (i32, i32, i32) {
    %c0_i32 = arith.constant 0 : i32
    %c0_i32_0 = arith.constant 0 : i32
    %c0_i32_1 = arith.constant 0 : i32
    return %c0_i32, %arg0, %c0_i32_0 : i32, i32, i32
  }
  func.func @transform_2(%arg0: i32) -> (i32, i32) {
    %c0_i32 = arith.constant 0 : i32
    %c0_i32_0 = arith.constant 0 : i32
    return %arg0, %c0_i32 : i32, i32
  }
}

</mosaic_0001>

<llo_original>
// kernel: tpu_custom_call.1
$region0: #{tpu_custom_call.1}
  #allocation0 [shape = 'u32[]', space=smem, size = 0x4, offset = 0x4, fixed_abs, tag = 'smem constant byte address 0x4 - core index']
  #allocation1 [shape = 'u32[144,128]{1,0:T(1,128)}', space=vmem, size = 0x12000, scoped, tag = 'internal scratch']
  %s0 = inlined_call_operand.hbm [shape: f32[3,3], index: 0, kind: input, shape index: {}]
  %s1 = inlined_call_operand.hbm [shape: f32[4,8,128], index: 1, kind: input, shape index: {}]
  %s2 = inlined_call_operand.hbm [shape: f32[8,128], index: 2, kind: output, shape index: {}]
  %s3 = sld [smem:[#allocation0]]
  $region26: #{tpu_custom_call.1} parent=0
    _
  %s5 = ssub.s32 1, %s3
  %s6 = scalar_select 0, %s5, %s3
  $region1: #{tpu_custom_call.1} parent=0
    #allocation2 [shape = 'u8[2048]{0}', space=smem, size = 0x800, scoped, tag = 'input window, operand 0, single buffered']
    #allocation3 [shape = 's32[1]{0}', space=sflag, size = 0x4, scoped, tag = 'scoped memory for tpu_custom_call.1']
    #allocation4 [shape = 's32[1]{0}', space=sflag, size = 0x4, scoped, tag = 'scoped memory for tpu_custom_call.1']
    #allocation5 [shape = 's32[1]{0}', space=sflag, size = 0x4, scoped, tag = 'scoped memory for tpu_custom_call.1']
    #allocation6 [shape = 'u8[16384]{0}', space=vmem, size = 0x4000, scoped, tag = 'input window, operand 1, single buffered']
    #allocation7 [shape = 'u8[4096]{0}', space=vmem, size = 0x1000, scoped, tag = 'output window, operand 0, single buffered']
    %7 = vsyncpa [#allocation5], 0
    %8 = vsyncpa [#allocation3], 0
    %9 = vsyncpa [#allocation4], 0
    // Predicated region
    $region2: #{tpu_custom_call.1} parent=1 // pred_check
      _
    $region3: #{tpu_custom_call.1} parent=1 // pred_check_branch
      %11 = sbr.rel (0) target = $region5
    $region4: #{tpu_custom_call.1} parent=1 // pred_region
      %s13 = ssub.s32 64, 64
      %14 = vsyncadd [#allocation5], %s13
      %17 = dma.hbm_to_smem %s0, 64, [#allocation2], [#allocation5]
    $region5: #{tpu_custom_call.1} parent=1 // pred_fallthru
      _
    // Predicated region
    $region6: #{tpu_custom_call.1} parent=1 // pred_check
      _
    $region7: #{tpu_custom_call.1} parent=1 // pred_check_branch
      %19 = sbr.rel (0) target = $region9
    $region8: #{tpu_custom_call.1} parent=1 // pred_region
      %s21 = ssub.s32 512, 512
      %22 = vsyncadd [#allocation3], %s21
      %s23 = sshll.u32 [#allocation6], 4
      %s24 = int_to_ptr.vmem [resolvable:$true] %s23
      %29 = dma.hbm_to_vmem [thread:$0]  %s1, 512, %s24, [#allocation3], 128, 128, 8
    $region9: #{tpu_custom_call.1} parent=1 // pred_fallthru
      _
    // Predicated region
    $region10: #{tpu_custom_call.1} parent=1 // pred_check
      _
    $region11: #{tpu_custom_call.1} parent=1 // pred_check_branch
      %31 = sbr.rel (0) target = $region13
    $region12: #{tpu_custom_call.1} parent=1 // pred_region
      %32 = dma.done [#allocation5], 64
    $region13: #{tpu_custom_call.1} parent=1 // pred_fallthru
      _
    // Predicated region
    $region14: #{tpu_custom_call.1} parent=1 // pred_check
      _
    $region15: #{tpu_custom_call.1} parent=1 // pred_check_branch
      %34 = sbr.rel (0) target = $region17
    $region16: #{tpu_custom_call.1} parent=1 // pred_region
      %35 = dma.done [#allocation3], 512
    $region17: #{tpu_custom_call.1} parent=1 // pred_fallthru
      _
    %36 = sfence
    %v37 = vld [vmem:[#allocation6] sm:$0xff]
    %s38 = scalar_lea.vmem [#allocation6], 8
    %v39 = vld [vmem:[%s38] sm:$0xff]
    %s40 = scalar_lea.vmem [#allocation6], 16
    %v41 = vld [vmem:[%s40] sm:$0xff]
    %s42 = scalar_lea.vmem [#allocation6], 24
    %v43 = vld [vmem:[%s42] sm:$0xff]
    %s44 = sld [smem:[#allocation2]]
    %s45 = sld [smem:[#allocation2 + $0x1]]
    %s46 = sld [smem:[#allocation2 + $0x2]]
    %s47 = sld [smem:[#allocation2 + $0x80]]
    %s48 = sld [smem:[#allocation2 + $0x81]]
    %s49 = sld [smem:[#allocation2 + $0x82]]
    %s50 = sld [smem:[#allocation2 + $0x100]]
    %s51 = sld [smem:[#allocation2 + $0x101]]
    %s52 = sld [smem:[#allocation2 + $0x102]]
    %v53 = vstv %s44
    %v54 = vmul.f32 %v53, %v37
    %v55 = vstv %s45
    %v56 = vmul.f32 %v55, %v39
    %v57 = vadd.f32 %v54, %v56
    %v58 = vstv %s46
    %v59 = vadd.f32 %v57, %v58
    %v60 = vstv %s47
    %v61 = vmul.f32 %v60, %v37
    %v62 = vstv %s48
    %v63 = vmul.f32 %v62, %v39
    %v64 = vadd.f32 %v61, %v63
    %v65 = vstv %s49
    %v66 = vadd.f32 %v64, %v65
    %v67 = vstv %s50
    %v68 = vmul.f32 %v67, %v37
    %v69 = vstv %s51
    %v70 = vmul.f32 %v69, %v39
    %v71 = vadd.f32 %v68, %v70
    %v72 = vstv %s52
    %v73 = vadd.f32 %v71, %v72
    %v74 = vmul.f32 %v53, %v41
    %v75 = vmul.f32 %v60, %v43
    %v76 = vadd.f32 %v74, %v75
    %v77 = vadd.f32 %v76, %v67
    %v78 = vmul.f32 %v55, %v41
    %v79 = vmul.f32 %v62, %v43
    %v80 = vadd.f32 %v78, %v79
    %v81 = vadd.f32 %v80, %v69
    %v82 = vmul.f32 %v41, %v59
    %v83 = vmul.f32 %v43, %v66
    %v84 = vadd.f32 %v82, %v83
    %v85 = vadd.f32 %v84, %v73
    %v86 = vmul.f32 %v77, %v77
    %v87 = vadd.f32 %v86, 1e-08
    %v88 = vmul.f32 %v81, %v81
    %v89 = vadd.f32 %v87, %v88
    %v90 = vmul.f32 %v59, %v59
    %v91 = vadd.f32 %v89, %v90
    %v92 = vmul.f32 %v66, %v66
    %v93 = vadd.f32 %v91, %v92
    %v94 = vmul.f32 %v85, %v85
    %v95 = vrcp.pop %v93
    %v96 = vmul.f32 %v94, %v95
    %97 = vst [vmem:[#allocation7] sm:$0xff] %v96
    // Predicated region
    $region18: #{tpu_custom_call.1} parent=1 // pred_check
      _
    $region19: #{tpu_custom_call.1} parent=1 // pred_check_branch
      %99 = sbr.rel (0) target = $region21
    $region20: #{tpu_custom_call.1} parent=1 // pred_region
      %s101 = ssub.s32 128, 128
      %102 = vsyncadd [#allocation4], %s101
      %s104 = sshll.u32 [#allocation7], 4
      %s105 = int_to_ptr.vmem [resolvable:$true] %s104
      %107 = dma.vmem_to_hbm [thread:$0]  %s105, 128, %s2, [#allocation4]
    $region21: #{tpu_custom_call.1} parent=1 // pred_fallthru
      _
    // Predicated region
    $region22: #{tpu_custom_call.1} parent=1 // pred_check
      _
    $region23: #{tpu_custom_call.1} parent=1 // pred_check_branch
      %109 = sbr.rel (0) target = $region25
    $region24: #{tpu_custom_call.1} parent=1 // pred_region
      %110 = dma.done [#allocation4], 128
    $region25: #{tpu_custom_call.1} parent=1 // pred_fallthru
      _
    %111 = vsyncpa [#allocation3], 1
    %112 = vsyncpa [#allocation4], 1
    %113 = vsyncpa [#allocation5], 1

</llo_original>
